<compile_context>
chip_gen: v7x
topology: tpu7x:2x2x1
jax: 0.10.0
libtpu: 0.0.40
codegen_flags: <defaults>
</compile_context>

<pallas_src>
import math
import jax
import jax.numpy as jnp
from jax.experimental import pallas as pl
from jax.experimental.pallas import tpu as pltpu

# ---- model hyper-parameters ----
STATE_DIM = 16
ACTION_DIM = 8
LATENT_DIM = 4
HIDDEN_DIM = 32
MAX_ACTION = 1.0        # exercises the `max_action * tanh(d3(a))` branch

# ---- packed layouts ----
PACK_W = HIDDEN_DIM                      # lane width of the packed parameter buffer (32)
IN_ROWS = 32                             # activation rows: [state(16) | action(8) | eps(4) | 0(4)]
EPS_ROW = STATE_DIM + ACTION_DIM         # 24
OUT_ROWS = ACTION_DIM + 2 * LATENT_DIM   # 16 output rows: [u(8) | mean(4) | std(4)]
MAX_TILE_B = 1024                        # cap on batch columns per grid step

MXU_DTYPE = jnp.bfloat16                 # matmul operand dtype (f32 accumulation)

# Row offsets inside the packed bf16 parameter buffer.
# All offsets are multiples of 16, so every static ref slice is bf16-(16,·)-tile aligned.
R_BIG = 0      # (64,32): rows 0:32 W_e1^T (cols 0:24 used), rows 32:64 W_d1_state^T (cols 0:16 used)
R_E2 = 64      # (32,32): W_e2^T
R_D2 = 96      # (32,32): W_d2^T
R_HEAD = 128   # (16,32): rows 0:4 W_mean^T, rows 4:8 W_log_std^T, rows 8:16 zero
R_D3 = 144     # (16,32): rows 0:8 W_d3^T, rows 8:16 zero
R_D1Z = 160    # (32,32): cols 0:4 W_d1_latent^T
R_BIAS = 192   # (64,32): bias columns (see pack_params)
N_PARAM_ROWS = 256


def vae_fused_kernel(x_ref, p_ref, out_ref):
    """One batch tile, feature-major layout.

    x_ref  : (32, T) bf16  rows = [state(16) | action(8) | eps(4) | pad(4)], T batch columns
    p_ref  : (256, 32) bf16 packed parameters (constant index_map -> VMEM resident)
    out_ref: (16, T) f32   rows = [u(8) | mean(4) | std(4)]
    """
    f32 = jnp.float32
    x = x_ref[...]                                          # bf16 (32, T)

    # weights stay bf16 (no per-step casts); biases upcast once per step (tiny)
    w_big = p_ref[R_BIG:R_BIG + 64, :]                      # (64, 32)
    w_e2 = p_ref[R_E2:R_E2 + 32, :]                         # (32, 32)
    w_d2 = p_ref[R_D2:R_D2 + 32, :]                         # (32, 32)
    w_head = p_ref[R_HEAD:R_HEAD + 16, :]                   # rows 0:8 used, 8:16 zero
    w_d3 = p_ref[R_D3:R_D3 + 16, :]                         # rows 0:8 used, 8:16 zero
    w_d1z = p_ref[R_D1Z:R_D1Z + 32, :].astype(f32)          # cols 0:4 used
    biases = p_ref[R_BIAS:R_BIAS + 64, :].astype(f32)       # (64, 32)

    b_big = biases[:, 0:1]                                  # (64,1) = [b_e1 ; b_d1]
    b_e2 = biases[0:32, 1:2]
    b_d2 = biases[0:32, 2:3]
    b_head = biases[0:8, 3:4]                               # [b_mean(4); b_log_std(4)]
    b_d3 = biases[0:8, 4:5]

    # ---- merged e1(cat[s,a]) + state-part of d1: one MXU pass, split by (8-aligned) row slice ----
    hd = jnp.dot(w_big, x, preferred_element_type=f32) + b_big     # (64, T)
    h = jnp.maximum(hd[0:32, :], 0.0)                              # relu(e1(...))
    d_pre = hd[32:64, :]                                           # d1 state part + b_d1 (pre-relu)

    # ---- encoder ----
    h = jnp.maximum(jnp.dot(w_e2, h.astype(MXU_DTYPE), preferred_element_type=f32) + b_e2, 0.0)
    head = jnp.dot(w_head, h.astype(MXU_DTYPE), preferred_element_type=f32)[0:8, :] + b_head
    mean = head[0:LATENT_DIM, :]                                   # (4, T)
    log_std = jnp.clip(head[LATENT_DIM:2 * LATENT_DIM, :], -4.0, 15.0)
    std = jnp.exp(log_std)

    # ---- reparameterize: z = mean + std * eps (eps supplied by host PRNG for determinism) ----
    eps = x[EPS_ROW:EPS_ROW + LATENT_DIM, :].astype(f32)
    z = mean + std * eps                                           # (4, T)

    # ---- decoder: d1 latent part as 4 unrolled VPU broadcast-FMAs (outer products) ----
    for j in range(LATENT_DIM):
        d_pre = d_pre + w_d1z[:, j:j + 1] * z[j:j + 1, :]
    d = jnp.maximum(d_pre, 0.0)
    d = jnp.maximum(jnp.dot(w_d2, d.astype(MXU_DTYPE), preferred_element_type=f32) + b_d2, 0.0)
    u = MAX_ACTION * jnp.tanh(
        jnp.dot(w_d3, d.astype(MXU_DTYPE), preferred_element_type=f32)[0:8, :] + b_d3)

    # ---- two aligned, lane-dense stores (batch fills the 128-lane axis -> unmasked vst) ----
    out_ref[0:ACTION_DIM, :] = u
    out_ref[ACTION_DIM:OUT_ROWS, :] = jnp.concatenate([mean, std], axis=0)


# ---------------------------------------------------------------------------
# host-side parameter handling
# ---------------------------------------------------------------------------
def init_raw_params(key):
    """PyTorch nn.Linear-style init U(-1/sqrt(fan_in), 1/sqrt(fan_in)); weights stored [in, out]."""
    def linear(k, fan_in, fan_out):
        kw, kb = jax.random.split(k)
        bound = 1.0 / math.sqrt(fan_in)
        wt = jax.random.uniform(kw, (fan_in, fan_out), jnp.float32, -bound, bound)
        bs = jax.random.uniform(kb, (fan_out,), jnp.float32, -bound, bound)
        return wt, bs

    ks = jax.random.split(key, 7)
    p = {}
    p["w_e1"], p["b_e1"] = linear(ks[0], STATE_DIM + ACTION_DIM, HIDDEN_DIM)
    p["w_e2"], p["b_e2"] = linear(ks[1], HIDDEN_DIM, HIDDEN_DIM)
    p["w_mean"], p["b_mean"] = linear(ks[2], HIDDEN_DIM, LATENT_DIM)
    p["w_lstd"], p["b_lstd"] = linear(ks[3], HIDDEN_DIM, LATENT_DIM)
    p["w_d1"], p["b_d1"] = linear(ks[4], STATE_DIM + LATENT_DIM, HIDDEN_DIM)
    p["w_d2"], p["b_d2"] = linear(ks[5], HIDDEN_DIM, HIDDEN_DIM)
    p["w_d3"], p["b_d3"] = linear(ks[6], HIDDEN_DIM, ACTION_DIM)
    return p


def pack_params(p):
    """Pack every (transposed) weight/bias into one tile-aligned bf16 (256, 32) buffer -> a single DMA."""
    buf = jnp.zeros((N_PARAM_ROWS, PACK_W), jnp.float32)
    # merged e1 / d1-state block (row-stacked W^T)
    buf = buf.at[R_BIG:R_BIG + HIDDEN_DIM, 0:STATE_DIM + ACTION_DIM].set(p["w_e1"].T)
    buf = buf.at[R_BIG + HIDDEN_DIM:R_BIG + 2 * HIDDEN_DIM, 0:STATE_DIM].set(p["w_d1"][:STATE_DIM].T)
    buf = buf.at[R_E2:R_E2 + HIDDEN_DIM, :].set(p["w_e2"].T)
    buf = buf.at[R_D2:R_D2 + HIDDEN_DIM, :].set(p["w_d2"].T)
    # fused mean | log_std head (rows 8:16 stay zero)
    buf = buf.at[R_HEAD:R_HEAD + LATENT_DIM, :].set(p["w_mean"].T)
    buf = buf.at[R_HEAD + LATENT_DIM:R_HEAD + 2 * LATENT_DIM, :].set(p["w_lstd"].T)
    buf = buf.at[R_D3:R_D3 + ACTION_DIM, :].set(p["w_d3"].T)
    buf = buf.at[R_D1Z:R_D1Z + HIDDEN_DIM, 0:LATENT_DIM].set(p["w_d1"][STATE_DIM:].T)
    # bias columns (broadcast along the batch/lane axis in-kernel)
    buf = buf.at[R_BIAS:R_BIAS + HIDDEN_DIM, 0].set(p["b_e1"])
    buf = buf.at[R_BIAS + HIDDEN_DIM:R_BIAS + 2 * HIDDEN_DIM, 0].set(p["b_d1"])
    buf = buf.at[R_BIAS:R_BIAS + HIDDEN_DIM, 1].set(p["b_e2"])
    buf = buf.at[R_BIAS:R_BIAS + HIDDEN_DIM, 2].set(p["b_d2"])
    buf = buf.at[R_BIAS:R_BIAS + LATENT_DIM, 3].set(p["b_mean"])
    buf = buf.at[R_BIAS + LATENT_DIM:R_BIAS + 2 * LATENT_DIM, 3].set(p["b_lstd"])
    buf = buf.at[R_BIAS:R_BIAS + ACTION_DIM, 4].set(p["b_d3"])
    return buf.astype(jnp.bfloat16)


# ---------------------------------------------------------------------------
# wrapper
# ---------------------------------------------------------------------------
def _tile_and_pad(b):
    """Batch tile: multiple of 128 (lane-dense), capped, and >=2 grid steps when the batch allows
    so the 'parallel' axis still feeds both v7x TensorCores (v5e/v6e have a single TC)."""
    bp0 = ((b + 127) // 128) * 128
    if bp0 >= 256:
        tile = min(MAX_TILE_B, ((bp0 // 2 + 127) // 128) * 128)
    else:
        tile = 128
    bp = ((bp0 + tile - 1) // tile) * tile
    return tile, bp


@jax.jit
def vae_forward(state, action, noise, packed_params):
    b = state.shape[0]
    tile, bp = _tile_and_pad(b)

    # Layout plumbing only: build the feature-major bf16 activation slab [state|action|eps|0]^T.
    # (In production, keep activations feature-major / bf16 upstream to skip this pass entirely.)
    x = jnp.concatenate(
        [state, action, noise,
         jnp.zeros((b, IN_ROWS - EPS_ROW - LATENT_DIM), state.dtype)], axis=-1)
    x = jnp.pad(x, ((0, bp - b), (0, 0))).astype(jnp.bfloat16).T          # (32, bp)

    out = pl.pallas_call(
        vae_fused_kernel,
        out_shape=jax.ShapeDtypeStruct((OUT_ROWS, bp), jnp.float32),
        grid=(bp // tile,),
        in_specs=[
            pl.BlockSpec((IN_ROWS, tile), lambda i: (0, i)),              # activations, pipelined per tile
            pl.BlockSpec((N_PARAM_ROWS, PACK_W), lambda i: (0, 0)),       # params: constant -> VMEM resident
        ],
        out_specs=pl.BlockSpec((OUT_ROWS, tile), lambda i: (0, i)),
        compiler_params=pltpu.CompilerParams(
            dimension_semantics=("parallel",)),
    )(x, packed_params)

    u = out[0:ACTION_DIM, :b].T
    mean = out[ACTION_DIM:ACTION_DIM + LATENT_DIM, :b].T
    std = out[ACTION_DIM + LATENT_DIM:OUT_ROWS, :b].T
    return u, mean, std


# ---------------------------------------------------------------------------
# pure-JAX f32 reference (mirrors the PyTorch module's forward())
# ---------------------------------------------------------------------------
def vae_reference(state, action, noise, p):
    h = jax.nn.relu(jnp.concatenate([state, action], -1) @ p["w_e1"] + p["b_e1"])
    h = jax.nn.relu(h @ p["w_e2"] + p["b_e2"])
    mean = h @ p["w_mean"] + p["b_mean"]
    log_std = jnp.clip(h @ p["w_lstd"] + p["b_lstd"], -4.0, 15.0)
    std = jnp.exp(log_std)
    z = mean + std * noise
    d = jax.nn.relu(jnp.concatenate([state, z], -1) @ p["w_d1"] + p["b_d1"])
    d = jax.nn.relu(d @ p["w_d2"] + p["b_d2"])
    u = MAX_ACTION * jnp.tanh(d @ p["w_d3"] + p["b_d3"])
    return u, mean, std


if __name__ == "__main__":
    key = jax.random.PRNGKey(0)
    k_p, k_data = jax.random.split(key)

    raw = init_raw_params(k_p)
    packed = pack_params(raw)

    # 384 -> padded to 512, two 256-col tiles (exercises padding + both v7x cores);
    # 48  -> single 128-col tile (exercises the small-batch path).
    for batch in (384, 48):
        ks, ka, kn = jax.random.split(jax.random.fold_in(k_data, batch), 3)
        state = jax.random.normal(ks, (batch, STATE_DIM), jnp.float32)
        action = jax.random.normal(ka, (batch, ACTION_DIM), jnp.float32)
        # reparameterization noise (torch.randn_like(std)) generated on host for determinism
        noise = jax.random.normal(kn, (batch, LATENT_DIM), jnp.float32)

        u, mean, std = jax.block_until_ready(vae_forward(state, action, noise, packed))

        assert u.shape == (batch, ACTION_DIM)
        assert mean.shape == (batch, LATENT_DIM)
        assert std.shape == (batch, LATENT_DIM)

        u_r, mean_r, std_r = vae_reference(state, action, noise, raw)
        # bf16 MXU operands / bf16-packed params & activations vs. pure-f32 reference
        assert jnp.allclose(u, u_r, atol=5e-2, rtol=5e-2), "u mismatch"
        assert jnp.allclose(mean, mean_r, atol=5e-2, rtol=5e-2), "mean mismatch"
        assert jnp.allclose(std, std_r, atol=5e-2, rtol=5e-2), "std mismatch"

    print("KERNEL_OK")
</pallas_src>

<mosaic_0001>
module attributes {stable_mosaic.version = 11 : i64} {
  func.func @vae_fused_kernel(%arg0: i32, %arg1: memref<32x256xbf16, #tpu.memory_space<vmem>>, %arg2: memref<256x32xbf16, #tpu.memory_space<vmem>>, %arg3: memref<16x256xf32, #tpu.memory_space<vmem>>) attributes {dimension_semantics = [#tpu.dimension_semantics<parallel>], iteration_bounds = array<i64: 2>, scalar_prefetch = 0 : i64, scratch_operands = 0 : i64, tpu.core_type = #tpu.core_type<tc>, window_params = [{transform_indices = @transform_0, window_bounds = array<i64: 32, 256>}, {pipeline_mode = #tpu.pipeline_mode<synchronous>, transform_indices = @transform_1, window_bounds = array<i64: 256, 32>}, {transform_indices = @transform_2, window_bounds = array<i64: 16, 256>}]} {
    %c0 = arith.constant 0 : index
    %c0_0 = arith.constant 0 : index
    %0 = vector.load %arg1[%c0, %c0_0] : memref<32x256xbf16, #tpu.memory_space<vmem>>, vector<32x256xbf16>
    %c0_1 = arith.constant 0 : index
    %c0_2 = arith.constant 0 : index
    %1 = vector.load %arg2[%c0_1, %c0_2] : memref<256x32xbf16, #tpu.memory_space<vmem>>, vector<64x32xbf16>
    %c64 = arith.constant 64 : index
    %c0_3 = arith.constant 0 : index
    %2 = vector.load %arg2[%c64, %c0_3] : memref<256x32xbf16, #tpu.memory_space<vmem>>, vector<32x32xbf16>
    %c96 = arith.constant 96 : index
    %c0_4 = arith.constant 0 : index
    %3 = vector.load %arg2[%c96, %c0_4] : memref<256x32xbf16, #tpu.memory_space<vmem>>, vector<32x32xbf16>
    %c128 = arith.constant 128 : index
    %c0_5 = arith.constant 0 : index
    %4 = vector.load %arg2[%c128, %c0_5] : memref<256x32xbf16, #tpu.memory_space<vmem>>, vector<16x32xbf16>
    %c144 = arith.constant 144 : index
    %c0_6 = arith.constant 0 : index
    %5 = vector.load %arg2[%c144, %c0_6] : memref<256x32xbf16, #tpu.memory_space<vmem>>, vector<16x32xbf16>
    %c160 = arith.constant 160 : index
    %c0_7 = arith.constant 0 : index
    %6 = vector.load %arg2[%c160, %c0_7] : memref<256x32xbf16, #tpu.memory_space<vmem>>, vector<32x32xbf16>
    %7 = arith.extf %6 : vector<32x32xbf16> to vector<32x32xf32>
    %c192 = arith.constant 192 : index
    %c0_8 = arith.constant 0 : index
    %8 = vector.load %arg2[%c192, %c0_8] : memref<256x32xbf16, #tpu.memory_space<vmem>>, vector<64x32xbf16>
    %9 = arith.extf %8 : vector<64x32xbf16> to vector<64x32xf32>
    %10 = vector.extract_strided_slice %9 {offsets = [0, 0], sizes = [64, 1], strides = [1, 1]} : vector<64x32xf32> to vector<64x1xf32>
    %11 = vector.extract_strided_slice %9 {offsets = [0, 1], sizes = [32, 1], strides = [1, 1]} : vector<64x32xf32> to vector<32x1xf32>
    %12 = vector.extract_strided_slice %9 {offsets = [0, 2], sizes = [32, 1], strides = [1, 1]} : vector<64x32xf32> to vector<32x1xf32>
    %13 = vector.extract_strided_slice %9 {offsets = [0, 3], sizes = [8, 1], strides = [1, 1]} : vector<64x32xf32> to vector<8x1xf32>
    %14 = vector.extract_strided_slice %9 {offsets = [0, 4], sizes = [8, 1], strides = [1, 1]} : vector<64x32xf32> to vector<8x1xf32>
    %cst = arith.constant dense<0.000000e+00> : vector<64x256xf32>
    %15 = tpu.matmul %1, %0, %cst {dimension_numbers = #tpu.dot_dimension_numbers<[1], [0], [0], [1], [0, 0, 1, 1], [], []>} : vector<64x32xbf16>, vector<32x256xbf16>, vector<64x256xf32> -> vector<64x256xf32>
    %16 = vector.broadcast %10 : vector<64x1xf32> to vector<64x256xf32>
    %17 = arith.addf %15, %16 : vector<64x256xf32>
    %18 = vector.extract_strided_slice %17 {offsets = [0, 0], sizes = [32, 256], strides = [1, 1]} : vector<64x256xf32> to vector<32x256xf32>
    %cst_9 = arith.constant 0.000000e+00 : f32
    %19 = vector.broadcast %cst_9 : f32 to vector<32x256xf32>
    %20 = arith.maximumf %18, %19 : vector<32x256xf32>
    %21 = vector.extract_strided_slice %17 {offsets = [32, 0], sizes = [32, 256], strides = [1, 1]} : vector<64x256xf32> to vector<32x256xf32>
    %22 = arith.truncf %20 : vector<32x256xf32> to vector<32x256xbf16>
    %cst_10 = arith.constant dense<0.000000e+00> : vector<32x256xf32>
    %23 = tpu.matmul %2, %22, %cst_10 {dimension_numbers = #tpu.dot_dimension_numbers<[1], [0], [0], [1], [0, 0, 1, 1], [], []>} : vector<32x32xbf16>, vector<32x256xbf16>, vector<32x256xf32> -> vector<32x256xf32>
    %24 = vector.broadcast %11 : vector<32x1xf32> to vector<32x256xf32>
    %25 = arith.addf %23, %24 : vector<32x256xf32>
    %cst_11 = arith.constant 0.000000e+00 : f32
    %26 = vector.broadcast %cst_11 : f32 to vector<32x256xf32>
    %27 = arith.maximumf %25, %26 : vector<32x256xf32>
    %28 = arith.truncf %27 : vector<32x256xf32> to vector<32x256xbf16>
    %cst_12 = arith.constant dense<0.000000e+00> : vector<16x256xf32>
    %29 = tpu.matmul %4, %28, %cst_12 {dimension_numbers = #tpu.dot_dimension_numbers<[1], [0], [0], [1], [0, 0, 1, 1], [], []>} : vector<16x32xbf16>, vector<32x256xbf16>, vector<16x256xf32> -> vector<16x256xf32>
    %30 = vector.extract_strided_slice %29 {offsets = [0, 0], sizes = [8, 256], strides = [1, 1]} : vector<16x256xf32> to vector<8x256xf32>
    %31 = vector.broadcast %13 : vector<8x1xf32> to vector<8x256xf32>
    %32 = arith.addf %30, %31 : vector<8x256xf32>
    %33 = vector.extract_strided_slice %32 {offsets = [0, 0], sizes = [4, 256], strides = [1, 1]} : vector<8x256xf32> to vector<4x256xf32>
    %34 = vector.extract_strided_slice %32 {offsets = [4, 0], sizes = [4, 256], strides = [1, 1]} : vector<8x256xf32> to vector<4x256xf32>
    %cst_13 = arith.constant -4.000000e+00 : f32
    %cst_14 = arith.constant 1.500000e+01 : f32
    %35 = vector.broadcast %cst_13 : f32 to vector<4x256xf32>
    %36 = arith.maximumf %35, %34 : vector<4x256xf32>
    %37 = vector.broadcast %cst_14 : f32 to vector<4x256xf32>
    %38 = arith.minimumf %37, %36 : vector<4x256xf32>
    %39 = math.exp %38 : vector<4x256xf32>
    %40 = vector.extract_strided_slice %0 {offsets = [24, 0], sizes = [4, 256], strides = [1, 1]} : vector<32x256xbf16> to vector<4x256xbf16>
    %41 = arith.extf %40 : vector<4x256xbf16> to vector<4x256xf32>
    %42 = arith.mulf %39, %41 : vector<4x256xf32>
    %43 = arith.addf %33, %42 : vector<4x256xf32>
    %44 = vector.extract_strided_slice %7 {offsets = [0, 0], sizes = [32, 1], strides = [1, 1]} : vector<32x32xf32> to vector<32x1xf32>
    %45 = vector.extract_strided_slice %43 {offsets = [0, 0], sizes = [1, 256], strides = [1, 1]} : vector<4x256xf32> to vector<1x256xf32>
    %46 = vector.broadcast %44 : vector<32x1xf32> to vector<32x256xf32>
    %47 = vector.broadcast %45 : vector<1x256xf32> to vector<32x256xf32>
    %48 = arith.mulf %46, %47 : vector<32x256xf32>
    %49 = arith.addf %21, %48 : vector<32x256xf32>
    %50 = vector.extract_strided_slice %7 {offsets = [0, 1], sizes = [32, 1], strides = [1, 1]} : vector<32x32xf32> to vector<32x1xf32>
    %51 = vector.extract_strided_slice %43 {offsets = [1, 0], sizes = [1, 256], strides = [1, 1]} : vector<4x256xf32> to vector<1x256xf32>
    %52 = vector.broadcast %50 : vector<32x1xf32> to vector<32x256xf32>
    %53 = vector.broadcast %51 : vector<1x256xf32> to vector<32x256xf32>
    %54 = arith.mulf %52, %53 : vector<32x256xf32>
    %55 = arith.addf %49, %54 : vector<32x256xf32>
    %56 = vector.extract_strided_slice %7 {offsets = [0, 2], sizes = [32, 1], strides = [1, 1]} : vector<32x32xf32> to vector<32x1xf32>
    %57 = vector.extract_strided_slice %43 {offsets = [2, 0], sizes = [1, 256], strides = [1, 1]} : vector<4x256xf32> to vector<1x256xf32>
    %58 = vector.broadcast %56 : vector<32x1xf32> to vector<32x256xf32>
    %59 = vector.broadcast %57 : vector<1x256xf32> to vector<32x256xf32>
    %60 = arith.mulf %58, %59 : vector<32x256xf32>
    %61 = arith.addf %55, %60 : vector<32x256xf32>
    %62 = vector.extract_strided_slice %7 {offsets = [0, 3], sizes = [32, 1], strides = [1, 1]} : vector<32x32xf32> to vector<32x1xf32>
    %63 = vector.extract_strided_slice %43 {offsets = [3, 0], sizes = [1, 256], strides = [1, 1]} : vector<4x256xf32> to vector<1x256xf32>
    %64 = vector.broadcast %62 : vector<32x1xf32> to vector<32x256xf32>
    %65 = vector.broadcast %63 : vector<1x256xf32> to vector<32x256xf32>
    %66 = arith.mulf %64, %65 : vector<32x256xf32>
    %67 = arith.addf %61, %66 : vector<32x256xf32>
    %cst_15 = arith.constant 0.000000e+00 : f32
    %68 = vector.broadcast %cst_15 : f32 to vector<32x256xf32>
    %69 = arith.maximumf %67, %68 : vector<32x256xf32>
    %70 = arith.truncf %69 : vector<32x256xf32> to vector<32x256xbf16>
    %cst_16 = arith.constant dense<0.000000e+00> : vector<32x256xf32>
    %71 = tpu.matmul %3, %70, %cst_16 {dimension_numbers = #tpu.dot_dimension_numbers<[1], [0], [0], [1], [0, 0, 1, 1], [], []>} : vector<32x32xbf16>, vector<32x256xbf16>, vector<32x256xf32> -> vector<32x256xf32>
    %72 = vector.broadcast %12 : vector<32x1xf32> to vector<32x256xf32>
    %73 = arith.addf %71, %72 : vector<32x256xf32>
    %cst_17 = arith.constant 0.000000e+00 : f32
    %74 = vector.broadcast %cst_17 : f32 to vector<32x256xf32>
    %75 = arith.maximumf %73, %74 : vector<32x256xf32>
    %76 = arith.truncf %75 : vector<32x256xf32> to vector<32x256xbf16>
    %cst_18 = arith.constant dense<0.000000e+00> : vector<16x256xf32>
    %77 = tpu.matmul %5, %76, %cst_18 {dimension_numbers = #tpu.dot_dimension_numbers<[1], [0], [0], [1], [0, 0, 1, 1], [], []>} : vector<16x32xbf16>, vector<32x256xbf16>, vector<16x256xf32> -> vector<16x256xf32>
    %78 = vector.extract_strided_slice %77 {offsets = [0, 0], sizes = [8, 256], strides = [1, 1]} : vector<16x256xf32> to vector<8x256xf32>
    %79 = vector.broadcast %14 : vector<8x1xf32> to vector<8x256xf32>
    %80 = arith.addf %78, %79 : vector<8x256xf32>
    %81 = math.tanh %80 : vector<8x256xf32>
    %cst_19 = arith.constant 1.000000e+00 : f32
    %82 = vector.broadcast %cst_19 : f32 to vector<8x256xf32>
    %83 = arith.mulf %82, %81 : vector<8x256xf32>
    %c0_20 = arith.constant 0 : index
    %c0_21 = arith.constant 0 : index
    %84 = vector.load %arg3[%c0_20, %c0_21] : memref<16x256xf32, #tpu.memory_space<vmem>>, vector<8x256xf32>
    tpu.vector_store %arg3[%c0_20, %c0_21], %83 {strides = array<i32>} : memref<16x256xf32, #tpu.memory_space<vmem>>, vector<8x256xf32>,
    %85 = tpu.concatenate %33, %39 in 0 : vector<4x256xf32>, vector<4x256xf32> -> vector<8x256xf32>
    %c8 = arith.constant 8 : index
    %c0_22 = arith.constant 0 : index
    %86 = vector.load %arg3[%c8, %c0_22] : memref<16x256xf32, #tpu.memory_space<vmem>>, vector<8x256xf32>
    tpu.vector_store %arg3[%c8, %c0_22], %85 {strides = array<i32>} : memref<16x256xf32, #tpu.memory_space<vmem>>, vector<8x256xf32>,
    return
  }
  func.func @transform_0(%arg0: i32) -> (i32, i32) {
    %c0_i32 = arith.constant 0 : i32
    %c0_i32_0 = arith.constant 0 : i32
    return %c0_i32, %arg0 : i32, i32
  }
  func.func @transform_1(%arg0: i32) -> (i32, i32) {
    %c0_i32 = arith.constant 0 : i32
    %c0_i32_0 = arith.constant 0 : i32
    %c0_i32_1 = arith.constant 0 : i32
    return %c0_i32, %c0_i32_0 : i32, i32
  }
  func.func @transform_2(%arg0: i32) -> (i32, i32) {
    %c0_i32 = arith.constant 0 : i32
    %c0_i32_0 = arith.constant 0 : i32
    return %c0_i32, %arg0 : i32, i32
  }
}

</mosaic_0001>

<llo_original>
// kernel: vae_forward.1
$region0: #{vae_forward.1}
  #allocation0 [shape = 'u32[]', space=smem, size = 0x4, offset = 0x4, fixed_abs, tag = 'smem constant byte address 0x4 - core index']
  #allocation1 [shape = 'u32[144,128]{1,0:T(1,128)}', space=vmem, size = 0x12000, scoped, tag = 'internal scratch']
  %s0 = inlined_call_operand.vmem [shape: bf16[32,512], index: 0, kind: input, shape index: {}]
  %s1 = inlined_call_operand.vmem [shape: bf16[256,32], index: 1, kind: input, shape index: {}]
  %s2 = inlined_call_operand.vmem [shape: f32[16,512], index: 2, kind: output, shape index: {}]
  %s3 = sld [smem:[#allocation0]]
  $region98: #{vae_forward.1} parent=0
    _
  %s5 = ssub.s32 1, %s3
  %s6 = scalar_select 0, %s5, %s3
  $region1: #{vae_forward.1} parent=0
    #allocation2 [shape = 'u8[32768]{0}', space=vmem, size = 0x8000, scoped, tag = 'input window, operand 0']
    #allocation3 [shape = 'u8[32768]{0}', space=vmem, size = 0x8000, scoped, tag = 'output window, operand 0']
    loop: start=0, step=1, limit=4
    $region2: #{vae_forward.1} parent=1 // loop_pre_header
      _
    $region3: #{vae_forward.1} parent=1 // loop_header
      %s8 = sphi 0, %s12
      %p9 = scmp.ge.s32.totalorder %s8, 4
      %s18 = sphi 0, %s20
      %s21 = sphi 0, %s18
      %s22 = sphi 0, %s21
      %s38 = sphi 0, %s22
      %s42 = sphi 0, %s42
      %s44 = sphi 0, %s42
      %s45 = sphi 0, %s44
      %s59 = sphi 0, %s45
      %s65 = sphi 0, %s67
      %s68 = sphi 0, %s65
      %s69 = sphi 0, %s68
      %s85 = sphi 0, %s69
    $region4: #{vae_forward.1} parent=1 // loop_header_branch
      %11 = sbr.rel (%p9) target = $region8
    $region5: #{vae_forward.1} parent=1 // loop_body
      %s13 = ssub.s32 %s8, 1
      %s14 = ssub.s32 %s8, 2
      %s15 = sadd.s32 %s8, 1
      %s16 = ssub.s32 %s8, %s15
      %p17 = scmp.eq.s32.totalorder %s16, 0
      %s19 = sadd.s32 %s18, 1
      %s20 = scalar_select %p17, %s18, %s19
      %p23 = pneg %p17
      %p24 = scmp.eq.s32.totalorder %s8, 1
      %p25 = por %p23, %p24
      %p26 = scmp.ne.s32.totalorder %s18, %s21
      %p27 = scmp.eq.s32.totalorder %s8, 0
      %p28 = por %p26, %p27
      %p29 = scmp.ne.s32.totalorder %s18, %s21
      %p30 = scmp.eq.s32.totalorder %s13, 1
      %p31 = por %p29, %p30
      %p32 = scmp.ne.s32.totalorder %s21, %s22
      %p33 = scmp.eq.s32.totalorder %s13, 0
      %p34 = por %p32, %p33
      %p35 = scmp.ne.s32.totalorder %s21, %s22
      %p36 = scmp.eq.s32.totalorder %s14, 1
      %p37 = por %p35, %p36
      %p39 = scmp.ne.s32.totalorder %s22, %s38
      %p40 = scmp.eq.s32.totalorder %s14, 0
      %p41 = por %p39, %p40
      %s43 = sadd.s32 %s42, 1
      %p46 = scmp.eq.s32.totalorder %s8, 1
      %p47 = scmp.ne.s32.totalorder %s42, %s44
      %p48 = scmp.eq.s32.totalorder %s8, 0
      %p49 = por %p47, %p48
      %p50 = scmp.ne.s32.totalorder %s42, %s44
      %p51 = scmp.eq.s32.totalorder %s13, 1
      %p52 = por %p50, %p51
      %p53 = scmp.ne.s32.totalorder %s44, %s45
      %p54 = scmp.eq.s32.totalorder %s13, 0
      %p55 = por %p53, %p54
      %p56 = scmp.ne.s32.totalorder %s44, %s45
      %p57 = scmp.eq.s32.totalorder %s14, 1
      %p58 = por %p56, %p57
      %p60 = scmp.ne.s32.totalorder %s45, %s59
      %p61 = scmp.eq.s32.totalorder %s14, 0
      %p62 = por %p60, %p61
      %s63 = ssub.s32 %s8, %s15
      %p64 = scmp.eq.s32.totalorder %s63, 0
      %s66 = sadd.s32 %s65, 1
      %s67 = scalar_select %p64, %s65, %s66
      %p70 = pneg %p64
      %p71 = scmp.eq.s32.totalorder %s8, 1
      %p72 = por %p70, %p71
      %p73 = scmp.ne.s32.totalorder %s65, %s68
      %p74 = scmp.eq.s32.totalorder %s8, 0
      %p75 = por %p73, %p74
      %p76 = scmp.ne.s32.totalorder %s65, %s68
      %p77 = scmp.eq.s32.totalorder %s13, 1
      %p78 = por %p76, %p77
      %p79 = scmp.ne.s32.totalorder %s68, %s69
      %p80 = scmp.eq.s32.totalorder %s13, 0
      %p81 = por %p79, %p80
      %p82 = scmp.ne.s32.totalorder %s68, %s69
      %p83 = scmp.eq.s32.totalorder %s14, 1
      %p84 = por %p82, %p83
      %p86 = scmp.ne.s32.totalorder %s69, %s85
      %p87 = scmp.eq.s32.totalorder %s14, 0
      %p88 = por %p86, %p87
      %p89 = scmp.le.s32.totalorder 1, %s8
      %p90 = scmp.lt.s32.totalorder %s8, 3
      %p91 = pnand %p89, %p90
      %p92 = pneg %p91
      // Predicated region
      $region9: #{vae_forward.1} parent=5 // pred_check
        _
      $region10: #{vae_forward.1} parent=5 // pred_check_branch
        %94 = sbr.rel (%p91) target = $region12
      $region11: #{vae_forward.1} parent=5 // pred_region
        %s95 = ssub.s32 %s8, 1
        // Predicated region
        $region13: #{vae_forward.1} parent=11 // pred_check
          %p96 = pneg %p55
        $region14: #{vae_forward.1} parent=11 // pred_check_branch
          %98 = sbr.rel (%p96) target = $region16
        $region15: #{vae_forward.1} parent=11 // pred_region
          _
        $region16: #{vae_forward.1} parent=11 // pred_fallthru
          _
      $region12: #{vae_forward.1} parent=5 // pred_fallthru
        _
      %p99 = scmp.lt.s32.totalorder %s8, 2
      // Predicated region
      $region17: #{vae_forward.1} parent=5 // pred_check
        %p100 = pneg %p99
      $region18: #{vae_forward.1} parent=5 // pred_check_branch
        %102 = sbr.rel (%p100) target = $region20
      $region19: #{vae_forward.1} parent=5 // pred_region
        // Predicated region
        $region21: #{vae_forward.1} parent=19 // pred_check
          %p103 = pneg %p28
        $region22: #{vae_forward.1} parent=19 // pred_check_branch
          %105 = sbr.rel (%p103) target = $region24
        $region23: #{vae_forward.1} parent=19 // pred_region
          %s106 = sand.u32 %s18, 1
          %s107 = sand.u32 %s18, 1
          %s108 = smul.addr %s107, 32
          %s109 = scalar_lea.vmem [#allocation2], %s108
          %s110 = smul.u32 2, %s8
          %s111 = smul.addr %s110, 4
          %s112 = scalar_lea.vmem %s0, %s111
          // Predicated region
          $region25: #{vae_forward.1} parent=23 // pred_check
            _
          $region26: #{vae_forward.1} parent=23 // pred_check_branch
            %114 = sbr.rel (0) target = $region28
          $region27: #{vae_forward.1} parent=23 // pred_region
            // Predicated region
            $region29: #{vae_forward.1} parent=27 // pred_check
              _
            $region30: #{vae_forward.1} parent=27 // pred_check_branch
              %116 = sbr.rel (0) target = $region32
            $region31: #{vae_forward.1} parent=27 // pred_region
              // Predicated region
              $region44: #{vae_forward.1} parent=31 // pred_check
                _
              $region45: #{vae_forward.1} parent=31 // pred_check_branch
                %137 = sbr.rel (0) target = $region47
              $region46: #{vae_forward.1} parent=31 // pred_region
                loop: start=0, step=1, limit=1
                $region48: #{vae_forward.1} parent=46 // loop_pre_header
                  _
                $region49: #{vae_forward.1} parent=46 // loop_header
                  %s139 = sphi 0, %s143
                  %p140 = scmp.ge.s32.totalorder %s139, 1
                  %s144 = sphi %s112, %s112
                  %s145 = sphi %s109, %s109
                $region50: #{vae_forward.1} parent=46 // loop_header_branch
                  %142 = sbr.rel (%p140) target = $region54
                $region51: #{vae_forward.1} parent=46 // loop_body
                  %v146 = vld [vmem:[%s144] sm:$0xff]
                  %147 = vst [vmem:[%s145] sm:$0xff] %v146
                  %v148 = vld [vmem:[%s144 + $0x10] sm:$0xff]
                  %149 = vst [vmem:[%s145 + $0x8] sm:$0xff] %v148
                  %v150 = vld [vmem:[%s144 + $0x20] sm:$0xff]
                  %151 = vst [vmem:[%s145 + $0x10] sm:$0xff] %v150
                  %v152 = vld [vmem:[%s144 + $0x30] sm:$0xff]
                  %153 = vst [vmem:[%s145 + $0x18] sm:$0xff] %v152
                $region52: #{vae_forward.1} parent=46 // loop_footer
                  %s143 = sadd.s32 1, %s139
                $region53: #{vae_forward.1} parent=46 // loop_footer_branch
                  %138 = sbr.rel target = $region49
                $region54: #{vae_forward.1} parent=46 // loop_exit
                  _
              $region47: #{vae_forward.1} parent=31 // pred_fallthru
                _
              // Predicated region
              $region55: #{vae_forward.1} parent=31 // pred_check
                _
              $region56: #{vae_forward.1} parent=31 // pred_check_branch
                %155 = sbr.rel target = $region58
              $region57: #{vae_forward.1} parent=31 // pred_region
                _
              $region58: #{vae_forward.1} parent=31 // pred_fallthru
                _
            $region32: #{vae_forward.1} parent=27 // pred_fallthru
              _
            // Predicated region
            $region33: #{vae_forward.1} parent=27 // pred_check
              _
            $region34: #{vae_forward.1} parent=27 // pred_check_branch
              %118 = sbr.rel target = $region36
            $region35: #{vae_forward.1} parent=27 // pred_region
              loop: start=0, step=1, limit=1
              $region37: #{vae_forward.1} parent=35 // loop_pre_header
                _
              $region38: #{vae_forward.1} parent=35 // loop_header
                %s121 = sphi 0, %s125
                %p122 = scmp.ge.s32.totalorder %s121, 1
                %s126 = sphi %s112, %s112
                %s127 = sphi %s109, %s109
              $region39: #{vae_forward.1} parent=35 // loop_header_branch
                %124 = sbr.rel (%p122) target = $region43
              $region40: #{vae_forward.1} parent=35 // loop_body
                %v128 = vld [vmem:[%s126] sm:$0xff]
                %129 = vst [vmem:[%s127] sm:$0xff] %v128
                %v130 = vld [vmem:[%s126 + $0x10] sm:$0xff]
                %131 = vst [vmem:[%s127 + $0x8] sm:$0xff] %v130
                %v132 = vld [vmem:[%s126 + $0x20] sm:$0xff]
                %133 = vst [vmem:[%s127 + $0x10] sm:$0xff] %v132
                %v134 = vld [vmem:[%s126 + $0x30] sm:$0xff]
                %135 = vst [vmem:[%s127 + $0x18] sm:$0xff] %v134
              $region41: #{vae_forward.1} parent=35 // loop_footer
                %s125 = sadd.s32 1, %s121
              $region42: #{vae_forward.1} parent=35 // loop_footer_branch
                %120 = sbr.rel target = $region38
              $region43: #{vae_forward.1} parent=35 // loop_exit
                _
            $region36: #{vae_forward.1} parent=27 // pred_fallthru
              _
          $region28: #{vae_forward.1} parent=23 // pred_fallthru
            _
          %156 = vnop
        $region24: #{vae_forward.1} parent=19 // pred_fallthru
          _
      $region20: #{vae_forward.1} parent=5 // pred_fallthru
        _
      %p157 = scmp.le.s32.totalorder 1, %s8
      %p158 = scmp.lt.s32.totalorder %s8, 3
      %p159 = pnand %p157, %p158
      %p160 = pneg %p159
      // Predicated region
      $region59: #{vae_forward.1} parent=5 // pred_check
        _
      $region60: #{vae_forward.1} parent=5 // pred_check_branch
        %162 = sbr.rel (%p159) target = $region62
      $region61: #{vae_forward.1} parent=5 // pred_region
        %s163 = ssub.s32 %s8, 1
        %s164 = sand.u32 %s21, 1
        %s165 = sand.u32 %s21, 1
        %s166 = smul.addr %s165, 32
        %s167 = scalar_lea.vmem [#allocation2], %s166
        // Predicated region
        $region63: #{vae_forward.1} parent=61 // pred_check
          %p168 = pneg %p34
        $region64: #{vae_forward.1} parent=61 // pred_check_branch
          %170 = sbr.rel (%p168) target = $region66
        $region65: #{vae_forward.1} parent=61 // pred_region
          _
        $region66: #{vae_forward.1} parent=61 // pred_fallthru
          _
        %s171 = sand.u32 %s21, 1
        %s172 = sand.u32 %s21, 1
        %s173 = smul.addr %s172, 32
        %s174 = scalar_lea.vmem [#allocation2], %s173
        %p175 = pneg %p34
        %p176 = pneg %p31
        %p177 = pneg %p55
        %p178 = pneg %p52
        %p179 = pneg %p81
        %p180 = pneg %p78
        %s181 = sand.u32 %s68, 1
        %s182 = sand.u32 %s68, 1
        %s183 = smul.addr %s182, 32
        %s184 = scalar_lea.vmem [#allocation3], %s183
        %s185 = smul.u32 2, %s13
        %s186 = smul.u32 2, %s13
        %v188 = vld [vmem:[%s167] sm:$0xff]
        %v189 = vld [vmem:[%s167 + $0x8] sm:$0xff]
        %v190 = vld [vmem:[%s167 + $0x10] sm:$0xff]
        %v191 = vld [vmem:[%s167 + $0x18] sm:$0xff]
        %v192 = vld [vmem:[%s1] sm:$0xf]
        %v193 = vld [vmem:[%s1 + $0x4] sm:$0xf]
        %v194 = vld [vmem:[%s1 + $0x8] sm:$0xf]
        %v195 = vld [vmem:[%s1 + $0xc] sm:$0xf]
        %v196 = vld [vmem:[%s1 + $0x10] sm:$0xf]
        %v197 = vld [vmem:[%s1 + $0x14] sm:$0xf]
        %v198 = vld [vmem:[%s1 + $0x18] sm:$0xf]
        %v199 = vld [vmem:[%s1 + $0x1c] sm:$0xf]
        %v200 = vld [vmem:[%s1 + $0x20] sm:$0xf]
        %v201 = vld [vmem:[%s1 + $0x24] sm:$0xf]
        %v202 = vld [vmem:[%s1 + $0x28] sm:$0xf]
        %v203 = vld [vmem:[%s1 + $0x2c] sm:$0xf]
        %v204 = vld [vmem:[%s1 + $0x30] sm:$0xf]
        %v205 = vld [vmem:[%s1 + $0x34] sm:$0xf]
        %v206 = vld [vmem:[%s1 + $0x38] sm:$0xf]
        %v207 = vld [vmem:[%s1 + $0x3c] sm:$0xf]
        %v208 = vld [vmem:[%s1 + $0x40] sm:$0xf]
        %v209 = vld [vmem:[%s1 + $0x44] sm:$0xf]
        %v210 = vld [vmem:[%s1 + $0x48] sm:$0xf]
        %v211 = vld [vmem:[%s1 + $0x4c] sm:$0xf]
        %v212 = vld [vmem:[%s1 + $0x50] sm:$0xf]
        %v213 = vld [vmem:[%s1 + $0x54] sm:$0xf]
        %v214 = vld [vmem:[%s1 + $0x58] sm:$0xf]
        %v215 = vld [vmem:[%s1 + $0x5c] sm:$0xf]
        %v216 = vunpack.c.l.bf16 %v212
        %v217 = vunpack.c.l.bf16 %v213
        %v218 = vunpack.c.l.bf16 %v214
        %v219 = vunpack.c.l.bf16 %v215
        %v220 = vld [vmem:[%s1 + $0x60] sm:$0xf]
        %v221 = vld [vmem:[%s1 + $0x64] sm:$0xf]
        %v222 = vld [vmem:[%s1 + $0x68] sm:$0xf]
        %v223 = vld [vmem:[%s1 + $0x6c] sm:$0xf]
        %v224 = vld [vmem:[%s1 + $0x70] sm:$0xf]
        %v225 = vld [vmem:[%s1 + $0x74] sm:$0xf]
        %v226 = vld [vmem:[%s1 + $0x78] sm:$0xf]
        %v227 = vld [vmem:[%s1 + $0x7c] sm:$0xf]
        %v228 = vunpack.c.l.bf16 %v220
        %v229 = vunpack.c.l.bf16 %v221
        %v230 = vunpack.c.l.bf16 %v222
        %v231 = vunpack.c.l.bf16 %v223
        %v232 = vunpack.c.l.bf16 %v224
        %v233 = vunpack.c.l.bf16 %v225
        %v234 = vunpack.c.l.bf16 %v226
        %v235 = vunpack.c.l.bf16 %v227
        %237 = vset.pattern.permute.xlu0 0
        %238 = vperm.xlu0 %237, %v228
        %v239 = vpop.permute.xlu0 %238
        %242 = vset.pattern.permute.xlu0 0
        %243 = vperm.xlu0 %242, %v229
        %v244 = vpop.permute.xlu0 %243
        %247 = vset.pattern.permute.xlu0 0
        %248 = vperm.xlu0 %247, %v230
        %v249 = vpop.permute.xlu0 %248
        %252 = vset.pattern.permute.xlu0 0
        %253 = vperm.xlu0 %252, %v231
        %v254 = vpop.permute.xlu0 %253
        %257 = vset.pattern.permute.xlu0 0
        %258 = vperm.xlu0 %257, %v232
        %v259 = vpop.permute.xlu0 %258
        %262 = vset.pattern.permute.xlu0 0
        %263 = vperm.xlu0 %262, %v233
        %v264 = vpop.permute.xlu0 %263
        %267 = vset.pattern.permute.xlu0 0
        %268 = vperm.xlu0 %267, %v234
        %v269 = vpop.permute.xlu0 %268
        %272 = vset.pattern.permute.xlu0 0
        %273 = vperm.xlu0 %272, %v235
        %v274 = vpop.permute.xlu0 %273
        %v284 = vunpack.c.l.b16 %v192
        %v285 = vunpack.c.l.b16 %v193
        %v286 = vunpack.c.l.b16 %v194
        %v287 = vunpack.c.l.b16 %v195
        %v288 = vunpack.c.l.b16 %v196
        %v289 = vunpack.c.l.b16 %v197
        %v290 = vunpack.c.l.b16 %v198
        %v291 = vunpack.c.l.b16 %v199
        %v292 = vpack.c.b16 %v285, %v284
        %v293 = vpack.c.b16 %v287, %v286
        %v294 = vpack.c.b16 %v289, %v288
        %v295 = vpack.c.b16 %v291, %v290
        %v300 = vunpack.c.l.b16 %v188
        %v301 = vunpack.c.h.b16 %v188
        %v302 = vunpack.c.l.b16 %v189
        %v303 = vunpack.c.h.b16 %v189
        %v304 = vunpack.c.l.b16 %v190
        %v305 = vunpack.c.h.b16 %v190
        %v306 = vunpack.c.l.b16 %v191
        %v307 = vunpack.c.h.b16 %v191
        %v308 = vpack.c.b16 %v302, %v300
        %v309 = vpack.c.b16 %v303, %v301
        %v310 = vpack.c.b16 %v306, %v304
        %v311 = vpack.c.b16 %v307, %v305
        %vm316 = vcmask 261120
        %v318 = vsel %vm316, %v292, 0
        %v321 = vsel %vm316, %v293, 0
        %v324 = vsel %vm316, %v294, 0
        %v327 = vsel %vm316, %v295, 0
        %329 = vmatprep.subr.bf16.mxu0 %v309
        %330 = vmatpush1.bf16.msra.mxu0 %v308
        %331 = vmatprep.subr.bf16.mxu0 %v311
        %332 = vmatpush1.bf16.msra.mxu0 %v310
        %333 = vmatprep.subr.bf16.mxu0 0
        %334 = vmatpush1.bf16.msra.mxu0 0
        %335 = vmatprep.subr.bf16.mxu0 0
        %336 = vmatpush1.bf16.msra.mxu0 0
        %337 = vmatprep.subr.bf16.mxu0 0
        %338 = vmatpush1.bf16.msra.mxu0 0
        %339 = vmatprep.subr.bf16.mxu0 0
        %340 = vmatpush1.bf16.msra.mxu0 0
        %341 = vmatprep.subr.bf16.mxu0 0
        %342 = vmatpush1.bf16.msra.mxu0 0
        %343 = vmatprep.subr.bf16.mxu0 0
        %344 = vmatpush1.bf16.msra.mxu0 0
        %345 = vmatprep.subr.bf16.mxu0 0
        %346 = vmatpush1.bf16.msra.mxu0 0
        %347 = vmatprep.subr.bf16.mxu0 0
        %348 = vmatpush1.bf16.msra.mxu0 0
        %349 = vmatprep.subr.bf16.mxu0 0
        %350 = vmatpush1.bf16.msra.mxu0 0
        %351 = vmatprep.subr.bf16.mxu0 0
        %352 = vmatpush1.bf16.msra.mxu0 0
        %353 = vmatprep.subr.bf16.mxu0 0
        %354 = vmatpush1.bf16.msra.mxu0 0
        %355 = vmatprep.subr.bf16.mxu0 0
        %356 = vmatpush1.bf16.msra.mxu0 0
        %357 = vmatprep.subr.bf16.mxu0 0
        %358 = vmatpush1.bf16.msra.mxu0 0
        %359 = vmatprep.subr.bf16.mxu0 0
        %360 = vmatpush1.bf16.msra.mxu0 0
        %361 = vmatprep.mubr.bf16.mxu0 0
        %362 = vmatmul.mubr.bf16.gmra.mrb[0].mxu0 %v318
        %v363 = vpop.f32.mrb[0].mxu0
        %v364 = vadd.f32 %v239, %v363
        %v365 = vpop.f32.mrb[0].mxu0
        %v366 = vadd.f32 %v239, %v365
        %v367 = vpop.f32.mrb[0].mxu0
        %v368 = vadd.f32 %v244, %v367
        %v369 = vpop.f32.mrb[0].mxu0
        %v370 = vadd.f32 %v244, %v369
        %371 = vmatprep.mubr.bf16.mxu0 0
        %372 = vmatmul.mubr.bf16.gmra.mrb[0].mxu0 %v321
        %v373 = vpop.f32.mrb[0].mxu0
        %v374 = vadd.f32 %v249, %v373
        %v375 = vpop.f32.mrb[0].mxu0
        %v376 = vadd.f32 %v249, %v375
        %v377 = vpop.f32.mrb[0].mxu0
        %v378 = vadd.f32 %v254, %v377
        %v379 = vpop.f32.mrb[0].mxu0
        %v380 = vadd.f32 %v254, %v379
        %381 = vmatprep.mubr.bf16.mxu0 0
        %382 = vmatmul.mubr.bf16.gmra.mrb[0].mxu0 %v324
        %v383 = vpop.f32.mrb[0].mxu0
        %v384 = vadd.f32 %v259, %v383
        %v385 = vpop.f32.mrb[0].mxu0
        %v386 = vadd.f32 %v259, %v385
        %v387 = vpop.f32.mrb[0].mxu0
        %v388 = vadd.f32 %v264, %v387
        %v389 = vpop.f32.mrb[0].mxu0
        %v390 = vadd.f32 %v264, %v389
        %391 = vmatprep.mubr.bf16.mxu0 0
        %392 = vmatmul.mubr.bf16.gmra.mrb[0].mxu0 %v327
        %v393 = vpop.f32.mrb[0].mxu0
        %v394 = vadd.f32 %v269, %v393
        %v395 = vpop.f32.mrb[0].mxu0
        %v396 = vadd.f32 %v269, %v395
        %v397 = vpop.f32.mrb[0].mxu0
        %v398 = vadd.f32 %v274, %v397
        %v399 = vpop.f32.mrb[0].mxu0
        %v400 = vadd.f32 %v274, %v399
        %401 = vdwg.mxu0
        %v402 = vmax.f32 %v364, 0.0
        %v403 = vmax.f32 %v366, 0.0
        %v404 = vmax.f32 %v368, 0.0
        %v405 = vmax.f32 %v370, 0.0
        %v406 = vmax.f32 %v374, 0.0
        %v407 = vmax.f32 %v376, 0.0
        %v408 = vmax.f32 %v378, 0.0
        %v409 = vmax.f32 %v380, 0.0
        %v410 = vpack.c.bf16 %v404, %v402
        %v411 = vpack.c.bf16 %v405, %v403
        %v412 = vpack.c.bf16 %v408, %v406
        %v413 = vpack.c.bf16 %v409, %v407
        %414 = vset.pattern.permute.xlu0 1
        %415 = vperm.xlu0 %414, %v228
        %v416 = vpop.permute.xlu0 %415
        %418 = vset.pattern.permute.xlu0 1
        %419 = vperm.xlu0 %418, %v229
        %v420 = vpop.permute.xlu0 %419
        %422 = vset.pattern.permute.xlu0 1
        %423 = vperm.xlu0 %422, %v230
        %v424 = vpop.permute.xlu0 %423
        %426 = vset.pattern.permute.xlu0 1
        %427 = vperm.xlu0 %426, %v231
        %v428 = vpop.permute.xlu0 %427
        %v434 = vunpack.c.l.b16 %v200
        %v435 = vunpack.c.l.b16 %v201
        %v436 = vunpack.c.l.b16 %v202
        %v437 = vunpack.c.l.b16 %v203
        %v438 = vpack.c.b16 %v435, %v434
        %v439 = vpack.c.b16 %v437, %v436
        %v441 = vsel %vm316, %v438, 0
        %v444 = vsel %vm316, %v439, 0
        %446 = vmatprep.subr.bf16.mxu0 %v411
        %447 = vmatpush1.bf16.msra.mxu0 %v410
        %448 = vmatprep.subr.bf16.mxu0 %v413
        %449 = vmatpush1.bf16.msra.mxu0 %v412
        %450 = vmatprep.subr.bf16.mxu0 0
        %451 = vmatpush1.bf16.msra.mxu0 0
        %452 = vmatprep.subr.bf16.mxu0 0
        %453 = vmatpush1.bf16.msra.mxu0 0
        %454 = vmatprep.subr.bf16.mxu0 0
        %455 = vmatpush1.bf16.msra.mxu0 0
        %456 = vmatprep.subr.bf16.mxu0 0
        %457 = vmatpush1.bf16.msra.mxu0 0
        %458 = vmatprep.subr.bf16.mxu0 0
        %459 = vmatpush1.bf16.msra.mxu0 0
        %460 = vmatprep.subr.bf16.mxu0 0
        %461 = vmatpush1.bf16.msra.mxu0 0
        %462 = vmatprep.subr.bf16.mxu0 0
        %463 = vmatpush1.bf16.msra.mxu0 0
        %464 = vmatprep.subr.bf16.mxu0 0
        %465 = vmatpush1.bf16.msra.mxu0 0
        %466 = vmatprep.subr.bf16.mxu0 0
        %467 = vmatpush1.bf16.msra.mxu0 0
        %468 = vmatprep.subr.bf16.mxu0 0
        %469 = vmatpush1.bf16.msra.mxu0 0
        %470 = vmatprep.subr.bf16.mxu0 0
        %471 = vmatpush1.bf16.msra.mxu0 0
        %472 = vmatprep.subr.bf16.mxu0 0
        %473 = vmatpush1.bf16.msra.mxu0 0
        %474 = vmatprep.subr.bf16.mxu0 0
        %475 = vmatpush1.bf16.msra.mxu0 0
        %476 = vmatprep.subr.bf16.mxu0 0
        %477 = vmatpush1.bf16.msra.mxu0 0
        %478 = vmatprep.mubr.bf16.mxu0 0
        %479 = vmatmul.mubr.bf16.gmra.mrb[0].mxu0 %v441
        %v480 = vpop.f32.mrb[0].mxu0
        %v481 = vadd.f32 %v416, %v480
        %v482 = vpop.f32.mrb[0].mxu0
        %v483 = vadd.f32 %v416, %v482
        %v484 = vpop.f32.mrb[0].mxu0
        %v485 = vadd.f32 %v420, %v484
        %v486 = vpop.f32.mrb[0].mxu0
        %v487 = vadd.f32 %v420, %v486
        %488 = vmatprep.mubr.bf16.mxu0 0
        %489 = vmatmul.mubr.bf16.gmra.mrb[0].mxu0 %v444
        %v490 = vpop.f32.mrb[0].mxu0
        %v491 = vadd.f32 %v424, %v490
        %v492 = vpop.f32.mrb[0].mxu0
        %v493 = vadd.f32 %v424, %v492
        %v494 = vpop.f32.mrb[0].mxu0
        %v495 = vadd.f32 %v428, %v494
        %v496 = vpop.f32.mrb[0].mxu0
        %v497 = vadd.f32 %v428, %v496
        %498 = vdwg.mxu0
        %v499 = vmax.f32 %v481, 0.0
        %v500 = vmax.f32 %v483, 0.0
        %v501 = vmax.f32 %v485, 0.0
        %v502 = vmax.f32 %v487, 0.0
        %v503 = vmax.f32 %v491, 0.0
        %v504 = vmax.f32 %v493, 0.0
        %v505 = vmax.f32 %v495, 0.0
        %v506 = vmax.f32 %v497, 0.0
        %v507 = vpack.c.bf16 %v501, %v499
        %v508 = vpack.c.bf16 %v502, %v500
        %v509 = vpack.c.bf16 %v505, %v503
        %v510 = vpack.c.bf16 %v506, %v504
        %v513 = vunpack.c.l.b16 %v208
        %v514 = vunpack.c.l.b16 %v209
        %v515 = vpack.c.b16 %v514, %v513
        %v517 = vsel %vm316, %v515, 0
        %519 = vmatprep.subr.bf16.mxu0 %v508
        %520 = vmatpush1.bf16.msra.mxu0 %v507
        %521 = vmatprep.subr.bf16.mxu0 %v510
        %522 = vmatpush1.bf16.msra.mxu0 %v509
        %523 = vmatprep.subr.bf16.mxu0 0
        %524 = vmatpush1.bf16.msra.mxu0 0
        %525 = vmatprep.subr.bf16.mxu0 0
        %526 = vmatpush1.bf16.msra.mxu0 0
        %527 = vmatprep.subr.bf16.mxu0 0
        %528 = vmatpush1.bf16.msra.mxu0 0
        %529 = vmatprep.subr.bf16.mxu0 0
        %530 = vmatpush1.bf16.msra.mxu0 0
        %531 = vmatprep.subr.bf16.mxu0 0
        %532 = vmatpush1.bf16.msra.mxu0 0
        %533 = vmatprep.subr.bf16.mxu0 0
        %534 = vmatpush1.bf16.msra.mxu0 0
        %535 = vmatprep.subr.bf16.mxu0 0
        %536 = vmatpush1.bf16.msra.mxu0 0
        %537 = vmatprep.subr.bf16.mxu0 0
        %538 = vmatpush1.bf16.msra.mxu0 0
        %539 = vmatprep.subr.bf16.mxu0 0
        %540 = vmatpush1.bf16.msra.mxu0 0
        %541 = vmatprep.subr.bf16.mxu0 0
        %542 = vmatpush1.bf16.msra.mxu0 0
        %543 = vmatprep.subr.bf16.mxu0 0
        %544 = vmatpush1.bf16.msra.mxu0 0
        %545 = vmatprep.subr.bf16.mxu0 0
        %546 = vmatpush1.bf16.msra.mxu0 0
        %547 = vmatprep.subr.bf16.mxu0 0
        %548 = vmatpush1.bf16.msra.mxu0 0
        %549 = vmatprep.subr.bf16.mxu0 0
        %550 = vmatpush1.bf16.msra.mxu0 0
        %551 = vmatprep.mubr.bf16.mxu0 0
        %552 = vmatmul.mubr.bf16.gmra.mrb[0].mxu0 %v517
        %v553 = vpop.f32.mrb[0].mxu0
        %v554 = vadd.f32 0.0, %v553
        %v555 = vpop.f32.mrb[0].mxu0
        %v556 = vadd.f32 0.0, %v555
        %v557 = vpop.f32.mrb[0].mxu0
        %v558 = vpop.f32.mrb[0].mxu0
        %559 = vdwg.mxu0
        %560 = vset.pattern.permute.xlu0 3
        %561 = vperm.xlu0 %560, %v228
        %v562 = vpop.permute.xlu0 %561
        %v564 = vadd.f32 %v554, %v562
        %v565 = vadd.f32 %v556, %v562
        %v566 = vmax.f32 %v564, -4.0
        %v567 = vmax.f32 %v565, -4.0
        %v568 = vmin.f32 %v566, 15.0
        %v569 = vmin.f32 %v567, 15.0
        %v570 = vmul.f32 %v568, 1.442695
        %v571 = vpow.pop %v570
        %v572 = vmul.f32 %v569, 1.442695
        %v573 = vpow.pop %v572
        %v574 = vunpack.c.l.bf16 %v191
        %v575 = vunpack.c.h.bf16 %v191
        %v578 = vrot.slane %v574, 4
        %v579 = vrot.slane %v575, 4
        %v582 = vmul.f32 %v571, %v578
        %v583 = vmul.f32 %v573, %v579
        %v586 = vrot.slane %v582, 4
        %v587 = vrot.slane %v583, 4
        %v590 = vadd.f32 %v564, %v586
        %v591 = vadd.f32 %v565, %v587
        %593 = vset.pattern.permute.xlu0 0
        %594 = vperm.xlu0 %593, %v216
        %v595 = vpop.permute.xlu0 %594
        %598 = vset.pattern.permute.xlu0 0
        %599 = vperm.xlu0 %598, %v217
        %v600 = vpop.permute.xlu0 %599
        %603 = vset.pattern.permute.xlu0 0
        %604 = vperm.xlu0 %603, %v218
        %v605 = vpop.permute.xlu0 %604
        %608 = vset.pattern.permute.xlu0 0
        %609 = vperm.xlu0 %608, %v219
        %v610 = vpop.permute.xlu0 %609
        %v612 = vlaneseq
        %v613 = vshrl.u32 %v612, 7
        %v614 = vsub.s32 0, %v613
        %v615 = vrot.slane %v590, %v614
        %v616 = vlaneseq
        %v617 = vshrl.u32 %v616, 7
        %v618 = vsub.s32 0, %v617
        %v619 = vrot.slane %v591, %v618
        %v620 = vmul.f32 %v595, %v615
        %v621 = vmul.f32 %v595, %v619
        %v622 = vmul.f32 %v600, %v615
        %v623 = vmul.f32 %v600, %v619
        %v624 = vmul.f32 %v605, %v615
        %v625 = vmul.f32 %v605, %v619
        %v626 = vmul.f32 %v610, %v615
        %v627 = vmul.f32 %v610, %v619
        %v628 = vadd.f32 %v384, %v620
        %v629 = vadd.f32 %v386, %v621
        %v630 = vadd.f32 %v388, %v622
        %v631 = vadd.f32 %v390, %v623
        %v632 = vadd.f32 %v394, %v624
        %v633 = vadd.f32 %v396, %v625
        %v634 = vadd.f32 %v398, %v626
        %v635 = vadd.f32 %v400, %v627
        %636 = vset.pattern.permute.xlu0 1
        %637 = vperm.xlu0 %636, %v216
        %v638 = vpop.permute.xlu0 %637
        %640 = vset.pattern.permute.xlu0 1
        %641 = vperm.xlu0 %640, %v217
        %v642 = vpop.permute.xlu0 %641
        %644 = vset.pattern.permute.xlu0 1
        %645 = vperm.xlu0 %644, %v218
        %v646 = vpop.permute.xlu0 %645
        %648 = vset.pattern.permute.xlu0 1
        %649 = vperm.xlu0 %648, %v219
        %v650 = vpop.permute.xlu0 %649
        %v652 = vlaneseq
        %v653 = vshrl.u32 %v652, 7
        %v654 = vsub.s32 1, %v653
        %v655 = vrot.slane %v590, %v654
        %v656 = vlaneseq
        %v657 = vshrl.u32 %v656, 7
        %v658 = vsub.s32 1, %v657
        %v659 = vrot.slane %v591, %v658
        %v660 = vmul.f32 %v638, %v655
        %v661 = vmul.f32 %v638, %v659
        %v662 = vmul.f32 %v642, %v655
        %v663 = vmul.f32 %v642, %v659
        %v664 = vmul.f32 %v646, %v655
        %v665 = vmul.f32 %v646, %v659
        %v666 = vmul.f32 %v650, %v655
        %v667 = vmul.f32 %v650, %v659
        %v668 = vadd.f32 %v628, %v660
        %v669 = vadd.f32 %v629, %v661
        %v670 = vadd.f32 %v630, %v662
        %v671 = vadd.f32 %v631, %v663
        %v672 = vadd.f32 %v632, %v664
        %v673 = vadd.f32 %v633, %v665
        %v674 = vadd.f32 %v634, %v666
        %v675 = vadd.f32 %v635, %v667
        %676 = vset.pattern.permute.xlu0 2
        %677 = vperm.xlu0 %676, %v216
        %v678 = vpop.permute.xlu0 %677
        %680 = vset.pattern.permute.xlu0 2
        %681 = vperm.xlu0 %680, %v217
        %v682 = vpop.permute.xlu0 %681
        %684 = vset.pattern.permute.xlu0 2
        %685 = vperm.xlu0 %684, %v218
        %v686 = vpop.permute.xlu0 %685
        %688 = vset.pattern.permute.xlu0 2
        %689 = vperm.xlu0 %688, %v219
        %v690 = vpop.permute.xlu0 %689
        %v692 = vlaneseq
        %v693 = vshrl.u32 %v692, 7
        %v694 = vsub.s32 2, %v693
        %v695 = vrot.slane %v590, %v694
        %v696 = vlaneseq
        %v697 = vshrl.u32 %v696, 7
        %v698 = vsub.s32 2, %v697
        %v699 = vrot.slane %v591, %v698
        %v700 = vmul.f32 %v678, %v695
        %v701 = vmul.f32 %v678, %v699
        %v702 = vmul.f32 %v682, %v695
        %v703 = vmul.f32 %v682, %v699
        %v704 = vmul.f32 %v686, %v695
        %v705 = vmul.f32 %v686, %v699
        %v706 = vmul.f32 %v690, %v695
        %v707 = vmul.f32 %v690, %v699
        %v708 = vadd.f32 %v668, %v700
        %v709 = vadd.f32 %v669, %v701
        %v710 = vadd.f32 %v670, %v702
        %v711 = vadd.f32 %v671, %v703
        %v712 = vadd.f32 %v672, %v704
        %v713 = vadd.f32 %v673, %v705
        %v714 = vadd.f32 %v674, %v706
        %v715 = vadd.f32 %v675, %v707
        %716 = vset.pattern.permute.xlu0 3
        %717 = vperm.xlu0 %716, %v216
        %v718 = vpop.permute.xlu0 %717
        %720 = vset.pattern.permute.xlu0 3
        %721 = vperm.xlu0 %720, %v217
        %v722 = vpop.permute.xlu0 %721
        %724 = vset.pattern.permute.xlu0 3
        %725 = vperm.xlu0 %724, %v218
        %v726 = vpop.permute.xlu0 %725
        %728 = vset.pattern.permute.xlu0 3
        %729 = vperm.xlu0 %728, %v219
        %v730 = vpop.permute.xlu0 %729
        %v732 = vlaneseq
        %v733 = vshrl.u32 %v732, 7
        %v734 = vsub.s32 3, %v733
        %v735 = vrot.slane %v590, %v734
        %v736 = vlaneseq
        %v737 = vshrl.u32 %v736, 7
        %v738 = vsub.s32 3, %v737
        %v739 = vrot.slane %v591, %v738
        %v740 = vmul.f32 %v718, %v735
        %v741 = vmul.f32 %v718, %v739
        %v742 = vmul.f32 %v722, %v735
        %v743 = vmul.f32 %v722, %v739
        %v744 = vmul.f32 %v726, %v735
        %v745 = vmul.f32 %v726, %v739
        %v746 = vmul.f32 %v730, %v735
        %v747 = vmul.f32 %v730, %v739
        %v748 = vadd.f32 %v708, %v740
        %v749 = vadd.f32 %v709, %v741
        %v750 = vadd.f32 %v710, %v742
        %v751 = vadd.f32 %v711, %v743
        %v752 = vadd.f32 %v712, %v744
        %v753 = vadd.f32 %v713, %v745
        %v754 = vadd.f32 %v714, %v746
        %v755 = vadd.f32 %v715, %v747
        %v756 = vmax.f32 %v748, 0.0
        %v757 = vmax.f32 %v749, 0.0
        %v758 = vmax.f32 %v750, 0.0
        %v759 = vmax.f32 %v751, 0.0
        %v760 = vmax.f32 %v752, 0.0
        %v761 = vmax.f32 %v753, 0.0
        %v762 = vmax.f32 %v754, 0.0
        %v763 = vmax.f32 %v755, 0.0
        %v764 = vpack.c.bf16 %v758, %v756
        %v765 = vpack.c.bf16 %v759, %v757
        %v766 = vpack.c.bf16 %v762, %v760
        %v767 = vpack.c.bf16 %v763, %v761
        %768 = vset.pattern.permute.xlu0 2
        %769 = vperm.xlu0 %768, %v228
        %v770 = vpop.permute.xlu0 %769
        %772 = vset.pattern.permute.xlu0 2
        %773 = vperm.xlu0 %772, %v229
        %v774 = vpop.permute.xlu0 %773
        %776 = vset.pattern.permute.xlu0 2
        %777 = vperm.xlu0 %776, %v230
        %v778 = vpop.permute.xlu0 %777
        %780 = vset.pattern.permute.xlu0 2
        %781 = vperm.xlu0 %780, %v231
        %v782 = vpop.permute.xlu0 %781
        %v788 = vunpack.c.l.b16 %v204
        %v789 = vunpack.c.l.b16 %v205
        %v790 = vunpack.c.l.b16 %v206
        %v791 = vunpack.c.l.b16 %v207
        %v792 = vpack.c.b16 %v789, %v788
        %v793 = vpack.c.b16 %v791, %v790
        %v795 = vsel %vm316, %v792, 0
        %v798 = vsel %vm316, %v793, 0
        %800 = vmatprep.subr.bf16.mxu0 %v765
        %801 = vmatpush1.bf16.msra.mxu0 %v764
        %802 = vmatprep.subr.bf16.mxu0 %v767
        %803 = vmatpush1.bf16.msra.mxu0 %v766
        %804 = vmatprep.subr.bf16.mxu0 0
        %805 = vmatpush1.bf16.msra.mxu0 0
        %806 = vmatprep.subr.bf16.mxu0 0
        %807 = vmatpush1.bf16.msra.mxu0 0
        %808 = vmatprep.subr.bf16.mxu0 0
        %809 = vmatpush1.bf16.msra.mxu0 0
        %810 = vmatprep.subr.bf16.mxu0 0
        %811 = vmatpush1.bf16.msra.mxu0 0
        %812 = vmatprep.subr.bf16.mxu0 0
        %813 = vmatpush1.bf16.msra.mxu0 0
        %814 = vmatprep.subr.bf16.mxu0 0
        %815 = vmatpush1.bf16.msra.mxu0 0
        %816 = vmatprep.subr.bf16.mxu0 0
        %817 = vmatpush1.bf16.msra.mxu0 0
        %818 = vmatprep.subr.bf16.mxu0 0
        %819 = vmatpush1.bf16.msra.mxu0 0
        %820 = vmatprep.subr.bf16.mxu0 0
        %821 = vmatpush1.bf16.msra.mxu0 0
        %822 = vmatprep.subr.bf16.mxu0 0
        %823 = vmatpush1.bf16.msra.mxu0 0
        %824 = vmatprep.subr.bf16.mxu0 0
        %825 = vmatpush1.bf16.msra.mxu0 0
        %826 = vmatprep.subr.bf16.mxu0 0
        %827 = vmatpush1.bf16.msra.mxu0 0
        %828 = vmatprep.subr.bf16.mxu0 0
        %829 = vmatpush1.bf16.msra.mxu0 0
        %830 = vmatprep.subr.bf16.mxu0 0
        %831 = vmatpush1.bf16.msra.mxu0 0
        %832 = vmatprep.mubr.bf16.mxu0 0
        %833 = vmatmul.mubr.bf16.gmra.mrb[0].mxu0 %v795
        %v834 = vpop.f32.mrb[0].mxu0
        %v835 = vadd.f32 %v770, %v834
        %v836 = vpop.f32.mrb[0].mxu0
        %v837 = vadd.f32 %v770, %v836
        %v838 = vpop.f32.mrb[0].mxu0
        %v839 = vadd.f32 %v774, %v838
        %v840 = vpop.f32.mrb[0].mxu0
        %v841 = vadd.f32 %v774, %v840
        %842 = vmatprep.mubr.bf16.mxu0 0
        %843 = vmatmul.mubr.bf16.gmra.mrb[0].mxu0 %v798
        %v844 = vpop.f32.mrb[0].mxu0
        %v845 = vadd.f32 %v778, %v844
        %v846 = vpop.f32.mrb[0].mxu0
        %v847 = vadd.f32 %v778, %v846
        %v848 = vpop.f32.mrb[0].mxu0
        %v849 = vadd.f32 %v782, %v848
        %v850 = vpop.f32.mrb[0].mxu0
        %v851 = vadd.f32 %v782, %v850
        %852 = vdwg.mxu0
        %v853 = vmax.f32 %v835, 0.0
        %v854 = vmax.f32 %v837, 0.0
        %v855 = vmax.f32 %v839, 0.0
        %v856 = vmax.f32 %v841, 0.0
        %v857 = vmax.f32 %v845, 0.0
        %v858 = vmax.f32 %v847, 0.0
        %v859 = vmax.f32 %v849, 0.0
        %v860 = vmax.f32 %v851, 0.0
        %v861 = vpack.c.bf16 %v855, %v853
        %v862 = vpack.c.bf16 %v856, %v854
        %v863 = vpack.c.bf16 %v859, %v857
        %v864 = vpack.c.bf16 %v860, %v858
        %v867 = vunpack.c.l.b16 %v210
        %v868 = vunpack.c.l.b16 %v211
        %v869 = vpack.c.b16 %v868, %v867
        %v871 = vsel %vm316, %v869, 0
        %873 = vmatprep.subr.bf16.mxu0 %v862
        %874 = vmatpush1.bf16.msra.mxu0 %v861
        %875 = vmatprep.subr.bf16.mxu0 %v864
        %876 = vmatpush1.bf16.msra.mxu0 %v863
        %877 = vmatprep.subr.bf16.mxu0 0
        %878 = vmatpush1.bf16.msra.mxu0 0
        %879 = vmatprep.subr.bf16.mxu0 0
        %880 = vmatpush1.bf16.msra.mxu0 0
        %881 = vmatprep.subr.bf16.mxu0 0
        %882 = vmatpush1.bf16.msra.mxu0 0
        %883 = vmatprep.subr.bf16.mxu0 0
        %884 = vmatpush1.bf16.msra.mxu0 0
        %885 = vmatprep.subr.bf16.mxu0 0
        %886 = vmatpush1.bf16.msra.mxu0 0
        %887 = vmatprep.subr.bf16.mxu0 0
        %888 = vmatpush1.bf16.msra.mxu0 0
        %889 = vmatprep.subr.bf16.mxu0 0
        %890 = vmatpush1.bf16.msra.mxu0 0
        %891 = vmatprep.subr.bf16.mxu0 0
        %892 = vmatpush1.bf16.msra.mxu0 0
        %893 = vmatprep.subr.bf16.mxu0 0
        %894 = vmatpush1.bf16.msra.mxu0 0
        %895 = vmatprep.subr.bf16.mxu0 0
        %896 = vmatpush1.bf16.msra.mxu0 0
        %897 = vmatprep.subr.bf16.mxu0 0
        %898 = vmatpush1.bf16.msra.mxu0 0
        %899 = vmatprep.subr.bf16.mxu0 0
        %900 = vmatpush1.bf16.msra.mxu0 0
        %901 = vmatprep.subr.bf16.mxu0 0
        %902 = vmatpush1.bf16.msra.mxu0 0
        %903 = vmatprep.subr.bf16.mxu0 0
        %904 = vmatpush1.bf16.msra.mxu0 0
        %905 = vmatprep.mubr.bf16.mxu0 0
        %906 = vmatmul.mubr.bf16.gmra.mrb[0].mxu0 %v871
        %v907 = vpop.f32.mrb[0].mxu0
        %v908 = vadd.f32 0.0, %v907
        %v909 = vpop.f32.mrb[0].mxu0
        %v910 = vadd.f32 0.0, %v909
        %v911 = vpop.f32.mrb[0].mxu0
        %v912 = vpop.f32.mrb[0].mxu0
        %913 = vdwg.mxu0
        %914 = vset.pattern.permute.xlu0 4
        %915 = vperm.xlu0 %914, %v228
        %v916 = vpop.permute.xlu0 %915
        %v918 = vadd.f32 %v908, %v916
        %v919 = vadd.f32 %v910, %v916
        %v920 = vtanh.pop %v918
        %v921 = vtanh.pop %v919
        %922 = vst [vmem:[%s184] sm:$0xff] %v920
        %923 = vst [vmem:[%s184 + $0x8] sm:$0xff] %v921
        %vm924 = vcmask 1043456
        %v925 = vsel %vm924, %v564, %v571
        %v926 = vsel %vm924, %v565, %v573
        %927 = vst [vmem:[%s184 + $0x10] sm:$0xff] %v925
        %928 = vst [vmem:[%s184 + $0x18] sm:$0xff] %v926
        %s929 = sand.u32 %s68, 1
        %s930 = sand.u32 %s68, 1
        %s931 = smul.addr %s930, 32
        %s932 = scalar_lea.vmem [#allocation3], %s931
        // Predicated region
        $region67: #{vae_forward.1} parent=61 // pred_check
          %p933 = pneg %p78
        $region68: #{vae_forward.1} parent=61 // pred_check_branch
          %935 = sbr.rel (%p933) target = $region70
        $region69: #{vae_forward.1} parent=61 // pred_region
          %s936 = smul.u32 2, %s13
          %s937 = smul.addr %s936, 8
          %s938 = scalar_lea.vmem %s2, %s937
          // Predicated region
          $region71: #{vae_forward.1} parent=69 // pred_check
            _
          $region72: #{vae_forward.1} parent=69 // pred_check_branch
            %940 = sbr.rel (0) target = $region74
          $region73: #{vae_forward.1} parent=69 // pred_region
            // Predicated region
            $region75: #{vae_forward.1} parent=73 // pred_check
              _
            $region76: #{vae_forward.1} parent=73 // pred_check_branch
              %942 = sbr.rel (0) target = $region78
            $region77: #{vae_forward.1} parent=73 // pred_region
              loop: start=0, step=1, limit=1
              $region79: #{vae_forward.1} parent=77 // loop_pre_header
                _
              $region80: #{vae_forward.1} parent=77 // loop_header
                %s944 = sphi 0, %s948
                %p945 = scmp.ge.s32.totalorder %s944, 1
                %s949 = sphi %s932, %s932
                %s950 = sphi %s938, %s938
              $region81: #{vae_forward.1} parent=77 // loop_header_branch
                %947 = sbr.rel (%p945) target = $region85
              $region82: #{vae_forward.1} parent=77 // loop_body
                %v951 = vld [vmem:[%s949] sm:$0xff]
                %952 = vst [vmem:[%s950] sm:$0xff] %v951
                %v953 = vld [vmem:[%s949 + $0x8] sm:$0xff]
                %954 = vst [vmem:[%s950 + $0x8] sm:$0xff] %v953
                %v955 = vld [vmem:[%s949 + $0x10] sm:$0xff]
                %956 = vst [vmem:[%s950 + $0x20] sm:$0xff] %v955
                %v957 = vld [vmem:[%s949 + $0x18] sm:$0xff]
                %958 = vst [vmem:[%s950 + $0x28] sm:$0xff] %v957
              $region83: #{vae_forward.1} parent=77 // loop_footer
                %s948 = sadd.s32 1, %s944
              $region84: #{vae_forward.1} parent=77 // loop_footer_branch
                %943 = sbr.rel target = $region80
              $region85: #{vae_forward.1} parent=77 // loop_exit
                _
            $region78: #{vae_forward.1} parent=73 // pred_fallthru
              _
            // Predicated region
            $region86: #{vae_forward.1} parent=73 // pred_check
              _
            $region87: #{vae_forward.1} parent=73 // pred_check_branch
              %960 = sbr.rel target = $region89
            $region88: #{vae_forward.1} parent=73 // pred_region
              _
            $region89: #{vae_forward.1} parent=73 // pred_fallthru
              _
          $region74: #{vae_forward.1} parent=69 // pred_fallthru
            _
          %961 = vnop
        $region70: #{vae_forward.1} parent=61 // pred_fallthru
          _
      $region62: #{vae_forward.1} parent=5 // pred_fallthru
        _
      %p962 = scmp.le.s32.totalorder 2, %s8
      // Predicated region
      $region90: #{vae_forward.1} parent=5 // pred_check
        %p963 = pneg %p962
      $region91: #{vae_forward.1} parent=5 // pred_check_branch
        %965 = sbr.rel (%p963) target = $region93
      $region92: #{vae_forward.1} parent=5 // pred_region
        %s966 = ssub.s32 %s8, 2
        // Predicated region
        $region94: #{vae_forward.1} parent=92 // pred_check
          %p967 = pneg %p84
        $region95: #{vae_forward.1} parent=92 // pred_check_branch
          %969 = sbr.rel (%p967) target = $region97
        $region96: #{vae_forward.1} parent=92 // pred_region
          %s970 = sand.u32 %s69, 1
          %s971 = sand.u32 %s69, 1
          %s972 = smul.addr %s971, 32
          %s973 = scalar_lea.vmem [#allocation3], %s972
        $region97: #{vae_forward.1} parent=92 // pred_fallthru
          _
      $region93: #{vae_forward.1} parent=5 // pred_fallthru
        _
    $region6: #{vae_forward.1} parent=1 // loop_footer
      %s12 = sadd.s32 1, %s8
    $region7: #{vae_forward.1} parent=1 // loop_footer_branch
      %7 = sbr.rel target = $region3
    $region8: #{vae_forward.1} parent=1 // loop_exit
      _

</llo_original>
